<compile_context>
chip_gen: v5e
topology: v5e:2x2
jax: 0.10.0
libtpu: 0.0.40
codegen_flags: <defaults>
</compile_context>

<pallas_src>
import jax
import jax.numpy as jnp
from jax.experimental import pallas as pl
from jax.experimental.pallas import tpu as pltpu


def _xavier_uniform(key, out_c, in_c):
    # nn.init.xavier_uniform_ on a Conv1d weight (out, in, 1): fan_in=in, fan_out=out
    bound = (6.0 / (in_c + out_c)) ** 0.5
    return jax.random.uniform(key, (out_c, in_c), jnp.float32, -bound, bound)


def _bias_init(key, out_c, in_c):
    # PyTorch Conv1d default bias init: U(-1/sqrt(fan_in), 1/sqrt(fan_in))
    bound = 1.0 / (in_c ** 0.5)
    return jax.random.uniform(key, (out_c,), jnp.float32, -bound, bound)


def init_state_critic_params(key, static_size, hidden_size):
    ks = jax.random.split(key, 8)
    return {
        "w_enc": _xavier_uniform(ks[0], hidden_size, static_size),
        "b_enc": _bias_init(ks[1], hidden_size, static_size),
        "w1": _xavier_uniform(ks[2], 20, hidden_size),
        "b1": _bias_init(ks[3], 20, hidden_size),
        "w2": _xavier_uniform(ks[4], 20, 20),
        "b2": _bias_init(ks[5], 20, 20),
        "w3": _xavier_uniform(ks[6], 1, 20),
        "b3": _bias_init(ks[7], 1, 20),
    }


def _critic_kernel(x_ref, wc_ref, bc_ref, w2_ref, b2_ref, w3_ref, b3l_ref,
                   seg_ref, out_ref):
    # x_ref: (Bt*L, C) rows for Bt whole batch elements; channels on the lane axis.
    x = x_ref[...]
    # Encoder fused with fc1: relu((W1 @ W_enc) x + (W1 b_enc + b1))
    o1 = jnp.maximum(
        jnp.dot(x, wc_ref[...], preferred_element_type=jnp.float32) + bc_ref[...],
        0.0)                                                            # (Bt*L, 20)
    # fc2
    o2 = jnp.maximum(
        jnp.dot(o1, w2_ref[...], preferred_element_type=jnp.float32) + b2_ref[...],
        0.0)                                                            # (Bt*L, 20)
    # Per-batch segmented sum over the sequence (MXU matmul against a 0/1 segment
    # matrix), then the sum-commuted 20 -> 1 projection: out_b = (sum_L o2_b)@w3 + L*b3.
    s = jnp.dot(seg_ref[...], o2, preferred_element_type=jnp.float32)   # (Bt, 20)
    out_ref[...] = (jnp.dot(s, w3_ref[...], preferred_element_type=jnp.float32)
                    + b3l_ref[...])                                     # (Bt, 1)


def state_critic_forward(static, params, *, target_rows=2048):
    """static: (B, static_size, seq_len) float32 (NCW, as in PyTorch). Returns (B, 1)."""
    # In production, accept channels-last (B, L, C) upstream and call
    # state_critic_forward_rows directly to avoid this extra HBM transpose pass.
    x_blc = jnp.transpose(static, (0, 2, 1)).astype(jnp.float32)        # (B, L, C)
    return state_critic_forward_rows(x_blc, params, target_rows=target_rows)


def state_critic_forward_rows(x_blc, params, *, target_rows=2048):
    B, L, C = x_blc.shape

    # ---- algebraic folds (done once, outside the kernel) ----
    wc = jnp.dot(params["w1"], params["w_enc"]).T                       # (C, 20)
    bc = (jnp.dot(params["w1"], params["b_enc"]) + params["b1"]).reshape(1, 20)
    w2 = params["w2"].T                                                 # (20, 20)
    b2 = params["b2"].reshape(1, 20)
    w3 = params["w3"].T                                                 # (20, 1)
    b3l = (float(L) * params["b3"]).reshape(1, 1)                       # L * b3 (sum-commuted)

    # ---- row tiling: Bt whole batch elements (Bt*L rows) per grid step ----
    bt = max(1, target_rows // max(L, 1))
    if bt >= B:
        Bt = B                        # single tile: blocks equal the full arrays (always legal)
    else:
        Bt = max(8, (bt // 8) * 8)    # multiple of 8 so tiled (Bt*L, C)/(Bt, 1) blocks are legal
    n_tiles = pl.cdiv(B, Bt)
    B_pad = n_tiles * Bt
    if B_pad != B:                    # zero-pad whole batch elements; sliced off below
        x_blc = jnp.concatenate(
            [x_blc, jnp.zeros((B_pad - B, L, C), x_blc.dtype)], axis=0)
    Mt = Bt * L
    x_rows = x_blc.reshape(B_pad * L, C)

    # 0/1 segment matrix: row r of a tile belongs to batch element r // L.
    seg = (jnp.arange(Mt, dtype=jnp.int32) // L
           == jnp.arange(Bt, dtype=jnp.int32)[:, None]).astype(jnp.float32)   # (Bt, Mt)

    const = lambda a: pl.BlockSpec(a.shape, lambda i: (0,) * a.ndim)

    out = pl.pallas_call(
        _critic_kernel,
        out_shape=jax.ShapeDtypeStruct((B_pad, 1), jnp.float32),
        grid_spec=pltpu.PrefetchScalarGridSpec(
            num_scalar_prefetch=0,
            grid=(n_tiles,),
            in_specs=[
                pl.BlockSpec((Mt, C), lambda i: (i, 0)),
                const(wc), const(bc), const(w2), const(b2),
                const(w3), const(b3l), const(seg),
            ],
            out_specs=pl.BlockSpec((Bt, 1), lambda i: (i, 0)),
        ),
        compiler_params=pltpu.CompilerParams(
            dimension_semantics=("parallel",)),
    )(x_rows, wc, bc, w2, b2, w3, b3l, seg)

    return out[:B]


def _reference_forward(static, params):
    # Pure-JAX reference mirroring the PyTorch module exactly (un-fused weights).
    x = jnp.transpose(static, (0, 2, 1))                         # (B, L, C)
    h = x @ params["w_enc"].T + params["b_enc"]                  # (B, L, H)
    o1 = jax.nn.relu(h @ params["w1"].T + params["b1"])          # (B, L, 20)
    o2 = jax.nn.relu(o1 @ params["w2"].T + params["b2"])         # (B, L, 20)
    o3 = o2 @ params["w3"].T + params["b3"]                      # (B, L, 1)
    return jnp.sum(o3, axis=1)                                   # (B, 1)


if __name__ == "__main__":
    key = jax.random.PRNGKey(0)
    k_param, k_in = jax.random.split(key)

    B, STATIC_SIZE, HIDDEN, SEQ = 2, 4, 32, 8
    params = init_state_critic_params(k_param, STATIC_SIZE, HIDDEN)
    static = jax.random.normal(k_in, (B, STATIC_SIZE, SEQ), jnp.float32)   # NCW

    out = jax.block_until_ready(state_critic_forward(static, params))
    ref = _reference_forward(static, params)

    assert out.shape == (B, 1)
    assert jnp.allclose(out, ref, atol=1e-4, rtol=1e-4), (out, ref)

    print("KERNEL_OK")
</pallas_src>

<mosaic_0001>
module attributes {stable_mosaic.version = 11 : i64} {
  func.func @_critic_kernel(%arg0: i32, %arg1: memref<16x4xf32, #tpu.memory_space<vmem>>, %arg2: memref<4x20xf32, #tpu.memory_space<vmem>>, %arg3: memref<1x20xf32, #tpu.memory_space<vmem>>, %arg4: memref<20x20xf32, #tpu.memory_space<vmem>>, %arg5: memref<1x20xf32, #tpu.memory_space<vmem>>, %arg6: memref<20x1xf32, #tpu.memory_space<vmem>>, %arg7: memref<1x1xf32, #tpu.memory_space<vmem>>, %arg8: memref<2x16xf32, #tpu.memory_space<vmem>>, %arg9: memref<2x1xf32, #tpu.memory_space<vmem>>) attributes {dimension_semantics = [#tpu.dimension_semantics<parallel>], iteration_bounds = array<i64: 1>, scalar_prefetch = 0 : i64, scratch_operands = 0 : i64, tpu.core_type = #tpu.core_type<tc>, window_params = [{transform_indices = @transform_0, window_bounds = array<i64: 16, 4>}, {pipeline_mode = #tpu.pipeline_mode<synchronous>, transform_indices = @transform_1, window_bounds = array<i64: 4, 20>}, {pipeline_mode = #tpu.pipeline_mode<synchronous>, transform_indices = @transform_2, window_bounds = array<i64: 1, 20>}, {pipeline_mode = #tpu.pipeline_mode<synchronous>, transform_indices = @transform_3, window_bounds = array<i64: 20, 20>}, {pipeline_mode = #tpu.pipeline_mode<synchronous>, transform_indices = @transform_4, window_bounds = array<i64: 1, 20>}, {pipeline_mode = #tpu.pipeline_mode<synchronous>, transform_indices = @transform_5, window_bounds = array<i64: 20, 1>}, {pipeline_mode = #tpu.pipeline_mode<synchronous>, transform_indices = @transform_6, window_bounds = array<i64: 1, 1>}, {pipeline_mode = #tpu.pipeline_mode<synchronous>, transform_indices = @transform_7, window_bounds = array<i64: 2, 16>}, {transform_indices = @transform_8, window_bounds = array<i64: 2, 1>}]} {
    %c0 = arith.constant 0 : index
    %c0_0 = arith.constant 0 : index
    %0 = vector.load %arg1[%c0, %c0_0] : memref<16x4xf32, #tpu.memory_space<vmem>>, vector<16x4xf32>
    %c0_1 = arith.constant 0 : index
    %c0_2 = arith.constant 0 : index
    %1 = vector.load %arg2[%c0_1, %c0_2] : memref<4x20xf32, #tpu.memory_space<vmem>>, vector<4x20xf32>
    %cst = arith.constant dense<0.000000e+00> : vector<16x20xf32>
    %2 = tpu.matmul %0, %1, %cst {dimension_numbers = #tpu.dot_dimension_numbers<[1], [0], [0], [1], [0, 0, 1, 1], [], []>} : vector<16x4xf32>, vector<4x20xf32>, vector<16x20xf32> -> vector<16x20xf32>
    %c0_3 = arith.constant 0 : index
    %c0_4 = arith.constant 0 : index
    %3 = vector.load %arg3[%c0_3, %c0_4] : memref<1x20xf32, #tpu.memory_space<vmem>>, vector<1x20xf32>
    %4 = vector.broadcast %3 : vector<1x20xf32> to vector<16x20xf32>
    %5 = arith.addf %2, %4 : vector<16x20xf32>
    %cst_5 = arith.constant 0.000000e+00 : f32
    %6 = vector.broadcast %cst_5 : f32 to vector<16x20xf32>
    %7 = arith.maximumf %5, %6 : vector<16x20xf32>
    %c0_6 = arith.constant 0 : index
    %c0_7 = arith.constant 0 : index
    %8 = vector.load %arg4[%c0_6, %c0_7] : memref<20x20xf32, #tpu.memory_space<vmem>>, vector<20x20xf32>
    %cst_8 = arith.constant dense<0.000000e+00> : vector<16x20xf32>
    %9 = tpu.matmul %7, %8, %cst_8 {dimension_numbers = #tpu.dot_dimension_numbers<[1], [0], [0], [1], [0, 0, 1, 1], [], []>} : vector<16x20xf32>, vector<20x20xf32>, vector<16x20xf32> -> vector<16x20xf32>
    %c0_9 = arith.constant 0 : index
    %c0_10 = arith.constant 0 : index
    %10 = vector.load %arg5[%c0_9, %c0_10] : memref<1x20xf32, #tpu.memory_space<vmem>>, vector<1x20xf32>
    %11 = vector.broadcast %10 : vector<1x20xf32> to vector<16x20xf32>
    %12 = arith.addf %9, %11 : vector<16x20xf32>
    %cst_11 = arith.constant 0.000000e+00 : f32
    %13 = vector.broadcast %cst_11 : f32 to vector<16x20xf32>
    %14 = arith.maximumf %12, %13 : vector<16x20xf32>
    %c0_12 = arith.constant 0 : index
    %c0_13 = arith.constant 0 : index
    %15 = vector.load %arg8[%c0_12, %c0_13] : memref<2x16xf32, #tpu.memory_space<vmem>>, vector<2x16xf32>
    %cst_14 = arith.constant dense<0.000000e+00> : vector<2x20xf32>
    %16 = tpu.matmul %15, %14, %cst_14 {dimension_numbers = #tpu.dot_dimension_numbers<[1], [0], [0], [1], [0, 0, 1, 1], [], []>} : vector<2x16xf32>, vector<16x20xf32>, vector<2x20xf32> -> vector<2x20xf32>
    %c0_15 = arith.constant 0 : index
    %c0_16 = arith.constant 0 : index
    %17 = vector.load %arg6[%c0_15, %c0_16] : memref<20x1xf32, #tpu.memory_space<vmem>>, vector<20x1xf32>
    %cst_17 = arith.constant dense<0.000000e+00> : vector<2x1xf32>
    %18 = tpu.matmul %16, %17, %cst_17 {dimension_numbers = #tpu.dot_dimension_numbers<[1], [0], [0], [1], [0, 0, 1, 1], [], []>} : vector<2x20xf32>, vector<20x1xf32>, vector<2x1xf32> -> vector<2x1xf32>
    %c0_18 = arith.constant 0 : index
    %c0_19 = arith.constant 0 : index
    %19 = vector.load %arg7[%c0_18, %c0_19] : memref<1x1xf32, #tpu.memory_space<vmem>>, vector<1x1xf32>
    %20 = vector.broadcast %19 : vector<1x1xf32> to vector<2x1xf32>
    %21 = arith.addf %18, %20 : vector<2x1xf32>
    %c0_20 = arith.constant 0 : index
    %c0_21 = arith.constant 0 : index
    %22 = vector.load %arg9[%c0_20, %c0_21] : memref<2x1xf32, #tpu.memory_space<vmem>>, vector<2x1xf32>
    tpu.vector_store %arg9[%c0_20, %c0_21], %21 {strides = array<i32>} : memref<2x1xf32, #tpu.memory_space<vmem>>, vector<2x1xf32>,
    return
  }
  func.func @transform_0(%arg0: i32) -> (i32, i32) {
    %c0_i32 = arith.constant 0 : i32
    %c0_i32_0 = arith.constant 0 : i32
    return %arg0, %c0_i32 : i32, i32
  }
  func.func @transform_1(%arg0: i32) -> (i32, i32) {
    %c0_i32 = arith.constant 0 : i32
    %c0_i32_0 = arith.constant 0 : i32
    %c0_i32_1 = arith.constant 0 : i32
    return %c0_i32, %c0_i32_0 : i32, i32
  }
  func.func @transform_2(%arg0: i32) -> (i32, i32) {
    %c0_i32 = arith.constant 0 : i32
    %c0_i32_0 = arith.constant 0 : i32
    %c0_i32_1 = arith.constant 0 : i32
    return %c0_i32, %c0_i32_0 : i32, i32
  }
  func.func @transform_3(%arg0: i32) -> (i32, i32) {
    %c0_i32 = arith.constant 0 : i32
    %c0_i32_0 = arith.constant 0 : i32
    %c0_i32_1 = arith.constant 0 : i32
    return %c0_i32, %c0_i32_0 : i32, i32
  }
  func.func @transform_4(%arg0: i32) -> (i32, i32) {
    %c0_i32 = arith.constant 0 : i32
    %c0_i32_0 = arith.constant 0 : i32
    %c0_i32_1 = arith.constant 0 : i32
    return %c0_i32, %c0_i32_0 : i32, i32
  }
  func.func @transform_5(%arg0: i32) -> (i32, i32) {
    %c0_i32 = arith.constant 0 : i32
    %c0_i32_0 = arith.constant 0 : i32
    %c0_i32_1 = arith.constant 0 : i32
    return %c0_i32, %c0_i32_0 : i32, i32
  }
  func.func @transform_6(%arg0: i32) -> (i32, i32) {
    %c0_i32 = arith.constant 0 : i32
    %c0_i32_0 = arith.constant 0 : i32
    %c0_i32_1 = arith.constant 0 : i32
    return %c0_i32, %c0_i32_0 : i32, i32
  }
  func.func @transform_7(%arg0: i32) -> (i32, i32) {
    %c0_i32 = arith.constant 0 : i32
    %c0_i32_0 = arith.constant 0 : i32
    %c0_i32_1 = arith.constant 0 : i32
    return %c0_i32, %c0_i32_0 : i32, i32
  }
  func.func @transform_8(%arg0: i32) -> (i32, i32) {
    %c0_i32 = arith.constant 0 : i32
    %c0_i32_0 = arith.constant 0 : i32
    return %arg0, %c0_i32 : i32, i32
  }
}

</mosaic_0001>

<llo_original>
// kernel: tpu_custom_call.1
$region0: #{tpu_custom_call.1}
  #allocation0 [shape = 'u32[]', space=smem, size = 0x4, offset = 0x4, fixed_abs, tag = 'smem constant byte address 0x4 - core index']
  #allocation1 [shape = 'u32[72,128]{1,0:T(1,128)}', space=vmem, size = 0x9000, scoped, tag = 'internal scratch']
  #allocation2 [shape = 'f32[1,1]{1,0:T(1,128)S(1)}', space=vmem, size = 0x200, scoped, tag = 'scoped memory for tpu_custom_call.1']
  %s0 = inlined_call_operand.vmem [shape: f32[16,4], index: 0, kind: input, shape index: {}]
  %s1 = inlined_call_operand.vmem [shape: f32[4,20], index: 1, kind: input, shape index: {}]
  %s2 = inlined_call_operand.vmem [shape: f32[1,20], index: 2, kind: input, shape index: {}]
  %s3 = inlined_call_operand.vmem [shape: f32[20,20], index: 3, kind: input, shape index: {}]
  %s4 = inlined_call_operand.vmem [shape: f32[1,20], index: 4, kind: input, shape index: {}]
  %s5 = inlined_call_operand.vmem [shape: f32[20,1], index: 5, kind: input, shape index: {}]
  %s6 = inlined_call_operand.<no memory space> [shape: f32[1,1], index: 6, kind: input, shape index: {}]
  %s7 = inlined_call_operand.vmem [shape: f32[2,16], index: 7, kind: input, shape index: {}]
  %s8 = inlined_call_operand.vmem [shape: f32[2,1], index: 8, kind: output, shape index: {}]
  %s9 = sld [smem:[#allocation0]]
  $region42: #{tpu_custom_call.1} parent=0
    _
  %s11 = ssub.s32 1, %s9
  %s12 = scalar_select 0, %s11, %s9
  %v13 = vstv %s6
  %14 = vst [vmem:[#allocation2] sm:$0x1] %v13
  // Predicated region
  $region2: #{tpu_custom_call.1} parent=0 // pred_check
    _
  $region3: #{tpu_custom_call.1} parent=0 // pred_check_branch
    %16 = sbr.rel (0) target = $region5
  $region4: #{tpu_custom_call.1} parent=0 // pred_region
    _
  $region5: #{tpu_custom_call.1} parent=0 // pred_fallthru
    _
  // Predicated region
  $region6: #{tpu_custom_call.1} parent=0 // pred_check
    _
  $region7: #{tpu_custom_call.1} parent=0 // pred_check_branch
    %18 = sbr.rel (0) target = $region9
  $region8: #{tpu_custom_call.1} parent=0 // pred_region
    _
  $region9: #{tpu_custom_call.1} parent=0 // pred_fallthru
    _
  // Predicated region
  $region10: #{tpu_custom_call.1} parent=0 // pred_check
    _
  $region11: #{tpu_custom_call.1} parent=0 // pred_check_branch
    %20 = sbr.rel (0) target = $region13
  $region12: #{tpu_custom_call.1} parent=0 // pred_region
    _
  $region13: #{tpu_custom_call.1} parent=0 // pred_fallthru
    _
  // Predicated region
  $region14: #{tpu_custom_call.1} parent=0 // pred_check
    _
  $region15: #{tpu_custom_call.1} parent=0 // pred_check_branch
    %22 = sbr.rel (0) target = $region17
  $region16: #{tpu_custom_call.1} parent=0 // pred_region
    _
  $region17: #{tpu_custom_call.1} parent=0 // pred_fallthru
    _
  // Predicated region
  $region18: #{tpu_custom_call.1} parent=0 // pred_check
    _
  $region19: #{tpu_custom_call.1} parent=0 // pred_check_branch
    %24 = sbr.rel (0) target = $region21
  $region20: #{tpu_custom_call.1} parent=0 // pred_region
    _
  $region21: #{tpu_custom_call.1} parent=0 // pred_fallthru
    _
  // Predicated region
  $region22: #{tpu_custom_call.1} parent=0 // pred_check
    _
  $region23: #{tpu_custom_call.1} parent=0 // pred_check_branch
    %26 = sbr.rel (0) target = $region25
  $region24: #{tpu_custom_call.1} parent=0 // pred_region
    _
  $region25: #{tpu_custom_call.1} parent=0 // pred_fallthru
    _
  // Predicated region
  $region26: #{tpu_custom_call.1} parent=0 // pred_check
    _
  $region27: #{tpu_custom_call.1} parent=0 // pred_check_branch
    %28 = sbr.rel (0) target = $region29
  $region28: #{tpu_custom_call.1} parent=0 // pred_region
    _
  $region29: #{tpu_custom_call.1} parent=0 // pred_fallthru
    _
  // Predicated region
  $region30: #{tpu_custom_call.1} parent=0 // pred_check
    _
  $region31: #{tpu_custom_call.1} parent=0 // pred_check_branch
    %30 = sbr.rel (0) target = $region33
  $region32: #{tpu_custom_call.1} parent=0 // pred_region
    _
  $region33: #{tpu_custom_call.1} parent=0 // pred_fallthru
    _
  %v31 = vld [vmem:[%s0] sm:$0xff]
  %v32 = vld [vmem:[%s0 + $0x8] sm:$0xff]
  %v33 = vld [vmem:[%s1] sm:$0xf]
  %v34 = vld [vmem:[%s2] sm:$0x1]
  %v36 = vperm.slane %v34, 0
  %vm38 = vcmask 31744
  %v40 = vsel %vm38, %v31, 0
  %v43 = vsel %vm38, %v32, 0
  %vm45 = vcmask 1043456
  %v47 = vsel %vm45, %v33, 0
  %49 = vmatpush.msra.mxu0 0.0
  %50 = vmatpush.msra.mxu0 0.0
  %51 = vmatpush.msra.mxu0 0.0
  %52 = vmatpush.msra.mxu0 0.0
  %53 = vmatpush.msra.mxu0 0.0
  %54 = vmatpush.msra.mxu0 0.0
  %55 = vmatpush.msra.mxu0 0.0
  %56 = vmatpush.msra.mxu0 0.0
  %57 = vmatpush.msra.mxu0 0.0
  %58 = vmatpush.msra.mxu0 0.0
  %59 = vmatpush.msra.mxu0 0.0
  %60 = vmatpush.msra.mxu0 0.0
  %61 = vmatpush.msra.mxu0 0.0
  %62 = vmatpush.msra.mxu0 0.0
  %63 = vmatpush.msra.mxu0 0.0
  %64 = vmatpush.msra.mxu0 %v47
  %65 = vmatmul.f32.gmra.mxu0 %v40
  %v66 = vpop.f32.mrf.mxu0
  %v67 = vadd.f32 %v36, %v66
  %68 = vmatmul.f32.gmra.mxu0 %v43
  %v69 = vpop.f32.mrf.mxu0
  %v70 = vadd.f32 %v36, %v69
  %71 = vdwg.mxu0
  %v72 = vmax.f32 %v67, 0.0
  %v73 = vmax.f32 %v70, 0.0
  %v74 = vld [vmem:[%s3] sm:$0xff]
  %v75 = vld [vmem:[%s3 + $0x8] sm:$0xff]
  %v76 = vld [vmem:[%s3 + $0x10] sm:$0xf]
  %v77 = vld [vmem:[%s4] sm:$0x1]
  %v79 = vperm.slane %v77, 0
  %vm81 = vcmask 162816
  %v83 = vsel %vm81, %v72, 0
  %v86 = vsel %vm81, %v73, 0
  %v89 = vsel %vm45, %v76, 0
  %91 = vmatpush.msra.mxu0 0.0
  %92 = vmatpush.msra.mxu0 0.0
  %93 = vmatpush.msra.mxu0 0.0
  %94 = vmatpush.msra.mxu0 0.0
  %95 = vmatpush.msra.mxu0 0.0
  %96 = vmatpush.msra.mxu0 0.0
  %97 = vmatpush.msra.mxu0 0.0
  %98 = vmatpush.msra.mxu0 0.0
  %99 = vmatpush.msra.mxu0 0.0
  %100 = vmatpush.msra.mxu0 0.0
  %101 = vmatpush.msra.mxu0 0.0
  %102 = vmatpush.msra.mxu0 0.0
  %103 = vmatpush.msra.mxu0 0.0
  %104 = vmatpush.msra.mxu0 %v89
  %105 = vmatpush.msra.mxu0 %v75
  %106 = vmatpush.msra.mxu0 %v74
  %107 = vmatmul.f32.gmra.mxu0 %v83
  %v108 = vpop.f32.mrf.mxu0
  %v109 = vadd.f32 %v79, %v108
  %110 = vmatmul.f32.gmra.mxu0 %v86
  %v111 = vpop.f32.mrf.mxu0
  %v112 = vadd.f32 %v79, %v111
  %113 = vdwg.mxu0
  %v114 = vmax.f32 %v109, 0.0
  %v115 = vmax.f32 %v112, 0.0
  %v116 = vld [vmem:[%s7] sm:$0x3]
  %vm117 = vcmask 130048
  %v119 = vsel %vm117, %v116, 0
  %121 = vmatpush.msra.mxu0 0.0
  %122 = vmatpush.msra.mxu0 0.0
  %123 = vmatpush.msra.mxu0 0.0
  %124 = vmatpush.msra.mxu0 0.0
  %125 = vmatpush.msra.mxu0 0.0
  %126 = vmatpush.msra.mxu0 0.0
  %127 = vmatpush.msra.mxu0 0.0
  %128 = vmatpush.msra.mxu0 0.0
  %129 = vmatpush.msra.mxu0 0.0
  %130 = vmatpush.msra.mxu0 0.0
  %131 = vmatpush.msra.mxu0 0.0
  %132 = vmatpush.msra.mxu0 0.0
  %133 = vmatpush.msra.mxu0 0.0
  %134 = vmatpush.msra.mxu0 0.0
  %135 = vmatpush.msra.mxu0 %v115
  %136 = vmatpush.msra.mxu0 %v114
  %137 = vmatmul.f32.gmra.mxu0 %v119
  %v138 = vpop.f32.mrf.mxu0
  %v139 = vadd.f32 0.0, %v138
  %140 = vdwg.mxu0
  %v141 = vld [vmem:[%s5] sm:$0xff]
  %v142 = vld [vmem:[%s5 + $0x8] sm:$0xff]
  %v143 = vld [vmem:[%s5 + $0x10] sm:$0xf]
  %v144 = vld [vmem:[#allocation2] sm:$0x1]
  %v146 = vperm.slane %v144, 0
  %v149 = vsel %vm81, %v139, 0
  %v152 = vsel %vm45, %v143, 0
  %154 = vmatpush.msra.mxu0 0.0
  %155 = vmatpush.msra.mxu0 0.0
  %156 = vmatpush.msra.mxu0 0.0
  %157 = vmatpush.msra.mxu0 0.0
  %158 = vmatpush.msra.mxu0 0.0
  %159 = vmatpush.msra.mxu0 0.0
  %160 = vmatpush.msra.mxu0 0.0
  %161 = vmatpush.msra.mxu0 0.0
  %162 = vmatpush.msra.mxu0 0.0
  %163 = vmatpush.msra.mxu0 0.0
  %164 = vmatpush.msra.mxu0 0.0
  %165 = vmatpush.msra.mxu0 0.0
  %166 = vmatpush.msra.mxu0 0.0
  %167 = vmatpush.msra.mxu0 %v152
  %168 = vmatpush.msra.mxu0 %v142
  %169 = vmatpush.msra.mxu0 %v141
  %170 = vmatmul.f32.gmra.mxu0 %v149
  %v171 = vpop.f32.mrf.mxu0
  %v172 = vadd.f32 %v146, %v171
  %173 = vdwg.mxu0
  %vm174 = vcmask 1024
  %175 = vst.msk [vmem:[%s8] sm:$0x3] %vm174, %v172
  // Predicated region
  $region34: #{tpu_custom_call.1} parent=0 // pred_check
    _
  $region35: #{tpu_custom_call.1} parent=0 // pred_check_branch
    %177 = sbr.rel (0) target = $region37
  $region36: #{tpu_custom_call.1} parent=0 // pred_region
    _
  $region37: #{tpu_custom_call.1} parent=0 // pred_fallthru
    _
  // Predicated region
  $region38: #{tpu_custom_call.1} parent=0 // pred_check
    _
  $region39: #{tpu_custom_call.1} parent=0 // pred_check_branch
    %179 = sbr.rel (0) target = $region41
  $region40: #{tpu_custom_call.1} parent=0 // pred_region
    _
  $region41: #{tpu_custom_call.1} parent=0 // pred_fallthru
    _

</llo_original>
